<compile_context>
chip_gen: v5e
topology: v5e:2x2
jax: 0.10.0
libtpu: 0.0.40
codegen_flags: <defaults>
</compile_context>

<pallas_src>
import functools

import jax
import jax.numpy as jnp
from jax.experimental import pallas as pl
from jax.experimental.pallas import tpu as pltpu

_LANE = 128


def _round_up(x, m):
    return ((x + m - 1) // m) * m


# ---------------------------------------------------------------------------
# Fused encoder + decoder kernel (single invocation, everything in VMEM)
# ---------------------------------------------------------------------------
def _fused_encdec_kernel(x_ref, w_ref, b_ref, out_ref, *, batch, seq, dp, hp, op):
    # One block-diagonal MXU matmul covers the encoder projection AND the
    # decoder x-projection; both biases are folded into the same add.
    y = jnp.dot(x_ref[...], w_ref[: 2 * dp, :],
                preferred_element_type=jnp.float32)                 # (M, Hp+Op)
    y = y + b_ref[...]                                              # [b_e | b_d]

    h = jnp.tanh(y[:, :hp])                                         # (M, Hp)  f32
    proj_x = y[:, hp:]                                              # (M, Op), b_d included

    # state @ W_s via linearity: apply W_s to every row, mean over seq after.
    proj_h = jnp.dot(h.astype(w_ref.dtype), w_ref[2 * dp :, :op],
                     preferred_element_type=jnp.float32)            # (M, Op)
    proj_s = jnp.sum(proj_h.reshape(batch, seq, op), axis=1) * (1.0 / seq)  # (B, Op)

    out = proj_x.reshape(batch, seq, op) + proj_s[:, None, :]
    out_ref[...] = out.reshape(batch * seq, op)                     # lane-dense store


# ---------------------------------------------------------------------------
# Parameter setup (done once): pad feature dims to multiples of 128, build
# the block-diagonal weight, pack everything into ONE bf16 weight array plus
# ONE f32 bias row.
# ---------------------------------------------------------------------------
def prepare_params(params):
    w_e = jnp.asarray(params["w_e"], jnp.float32)
    w_x = jnp.asarray(params["w_x"], jnp.float32)
    w_s = jnp.asarray(params["w_s"], jnp.float32)
    b_e = jnp.asarray(params["b_e"], jnp.float32).reshape(1, -1)
    b_d = jnp.asarray(params["b_d"], jnp.float32).reshape(1, -1)

    D, H = w_e.shape
    O = w_x.shape[1]
    Dp, Hp, Op = (_round_up(v, _LANE) for v in (D, H, O))

    # Rows [0, 2*Dp): blockdiag(W_e, W_x).  Rows [2*Dp, 2*Dp+Hp): W_s in cols [0, Op).
    # Zero padding is exact: padded rows/cols contribute 0 and tanh(0) = 0.
    w_packed = jnp.zeros((2 * Dp + Hp, Hp + Op), jnp.float32)
    w_packed = w_packed.at[:D, :H].set(w_e)
    w_packed = w_packed.at[Dp:Dp + D, Hp:Hp + O].set(w_x)
    w_packed = w_packed.at[2 * Dp:2 * Dp + H, :O].set(w_s)
    w_packed = w_packed.astype(jnp.bfloat16)       # bf16 MXU inputs, f32 accumulation

    bias = jnp.zeros((1, Hp + Op), jnp.float32)
    bias = bias.at[:, :H].set(b_e).at[:, Hp:Hp + O].set(b_d)

    dims = dict(dp=Dp, hp=Hp, op=Op, out_features=O)
    return w_packed, bias, dims


# ---------------------------------------------------------------------------
# Jitted forward: mirrors EncoderDecoder.forward(enc_X, dec_X)
# ---------------------------------------------------------------------------
@functools.partial(jax.jit, static_argnames=("dp", "hp", "op", "out_features"))
def encoder_decoder_forward(enc_x, dec_x, w_packed, bias, *, dp, hp, op, out_features):
    B, S, D = enc_x.shape
    M = B * S

    # (B,S,D) -> (M,D) leading-dim merge, zero-pad the feature axis to Dp,
    # K-concat encoder/decoder activations for the block-diagonal matmul,
    # cast MXU inputs to bf16.  All of this fuses under jit.
    def prep(x):
        return jnp.pad(x.reshape(M, D), ((0, 0), (0, dp - D)))

    x = jnp.concatenate([prep(enc_x), prep(dec_x)], axis=1).astype(jnp.bfloat16)

    vmem = pl.BlockSpec(memory_space=pltpu.MemorySpace.VMEM)
    kernel = functools.partial(_fused_encdec_kernel,
                               batch=B, seq=S, dp=dp, hp=hp, op=op)
    out2d = pl.pallas_call(
        kernel,
        out_shape=jax.ShapeDtypeStruct((M, op), jnp.float32),
        in_specs=[vmem, vmem, vmem],
        out_specs=vmem,
    )(x, w_packed, bias)

    # Reshape + padded-column slice are free (fused) under jit.
    return out2d.reshape(B, S, op)[:, :, :out_features]


# ---------------------------------------------------------------------------
# Pure-JAX reference (unpadded, f32) for correctness check
# ---------------------------------------------------------------------------
def _reference(enc_x, dec_x, params):
    h = jnp.tanh(jnp.einsum("bsd,dh->bsh", enc_x, params["w_e"]) + params["b_e"])
    state = jnp.mean(h, axis=1)
    out = (jnp.einsum("bsd,do->bso", dec_x, params["w_x"])
           + jnp.einsum("bh,ho->bo", state, params["w_s"])[:, None, :]
           + params["b_d"])
    return out


# ---------------------------------------------------------------------------
if __name__ == "__main__":
    B, S, D, H, O = 2, 8, 16, 32, 16

    key = jax.random.PRNGKey(0)
    k_ex, k_dx, k_we, k_wx, k_ws = jax.random.split(key, 5)

    enc_x = jax.random.normal(k_ex, (B, S, D), dtype=jnp.float32)
    dec_x = jax.random.normal(k_dx, (B, S, D), dtype=jnp.float32)

    params = {
        "w_e": jax.random.normal(k_we, (D, H), dtype=jnp.float32) * 0.1,
        "b_e": jnp.zeros((1, H), dtype=jnp.float32),
        "w_x": jax.random.normal(k_wx, (D, O), dtype=jnp.float32) * 0.1,
        "w_s": jax.random.normal(k_ws, (H, O), dtype=jnp.float32) * 0.1,
        "b_d": jnp.zeros((1, O), dtype=jnp.float32),
    }

    w_packed, bias, dims = prepare_params(params)

    out = encoder_decoder_forward(enc_x, dec_x, w_packed, bias, **dims)
    out = jax.block_until_ready(out)

    ref = _reference(enc_x, dec_x, params)
    assert out.shape == (B, S, O), out.shape
    # bf16 MXU operands (f32 accumulation) -> tolerance loosened vs f32 ref.
    err = float(jnp.max(jnp.abs(out - ref)))
    assert jnp.allclose(out, ref, atol=2e-2, rtol=2e-2), f"max abs err {err}"

    print("KERNEL_OK")
</pallas_src>

<mosaic_0001>
module attributes {stable_mosaic.version = 11 : i64} {
  func.func @_fused_encdec_kernel(%arg0: memref<16x256xbf16, #tpu.memory_space<vmem>>, %arg1: memref<384x256xbf16, #tpu.memory_space<vmem>>, %arg2: memref<1x256xf32, #tpu.memory_space<vmem>>, %arg3: memref<16x128xf32, #tpu.memory_space<vmem>>) attributes {dimension_semantics = [], scalar_prefetch = 0 : i64, scratch_operands = 0 : i64, tpu.core_type = #tpu.core_type<tc>} {
    %c0 = arith.constant 0 : index
    %c0_0 = arith.constant 0 : index
    %0 = vector.load %arg0[%c0, %c0_0] : memref<16x256xbf16, #tpu.memory_space<vmem>>, vector<16x256xbf16>
    %c0_1 = arith.constant 0 : index
    %c0_2 = arith.constant 0 : index
    %1 = vector.load %arg1[%c0_1, %c0_2] : memref<384x256xbf16, #tpu.memory_space<vmem>>, vector<256x256xbf16>
    %cst = arith.constant dense<0.000000e+00> : vector<16x256xf32>
    %2 = tpu.matmul %0, %1, %cst {dimension_numbers = #tpu.dot_dimension_numbers<[1], [0], [0], [1], [0, 0, 1, 1], [], []>} : vector<16x256xbf16>, vector<256x256xbf16>, vector<16x256xf32> -> vector<16x256xf32>
    %c0_3 = arith.constant 0 : index
    %c0_4 = arith.constant 0 : index
    %3 = vector.load %arg2[%c0_3, %c0_4] : memref<1x256xf32, #tpu.memory_space<vmem>>, vector<1x256xf32>
    %4 = vector.broadcast %3 : vector<1x256xf32> to vector<16x256xf32>
    %5 = arith.addf %2, %4 : vector<16x256xf32>
    %6 = vector.extract_strided_slice %5 {offsets = [0, 0], sizes = [16, 128], strides = [1, 1]} : vector<16x256xf32> to vector<16x128xf32>
    %7 = math.tanh %6 : vector<16x128xf32>
    %8 = vector.extract_strided_slice %5 {offsets = [0, 128], sizes = [16, 128], strides = [1, 1]} : vector<16x256xf32> to vector<16x128xf32>
    %9 = arith.truncf %7 : vector<16x128xf32> to vector<16x128xbf16>
    %c256 = arith.constant 256 : index
    %c0_5 = arith.constant 0 : index
    %10 = vector.load %arg1[%c256, %c0_5] : memref<384x256xbf16, #tpu.memory_space<vmem>>, vector<128x128xbf16>
    %cst_6 = arith.constant dense<0.000000e+00> : vector<16x128xf32>
    %11 = tpu.matmul %9, %10, %cst_6 {dimension_numbers = #tpu.dot_dimension_numbers<[1], [0], [0], [1], [0, 0, 1, 1], [], []>} : vector<16x128xbf16>, vector<128x128xbf16>, vector<16x128xf32> -> vector<16x128xf32>
    %12 = vector.shape_cast %11 : vector<16x128xf32> to vector<2x8x128xf32>
    %cst_7 = arith.constant dense<0.000000e+00> : vector<2x128xf32>
    %13 = vector.multi_reduction <add>, %12, %cst_7 [1] : vector<2x8x128xf32> to vector<2x128xf32>
    %cst_8 = arith.constant 1.250000e-01 : f32
    %14 = vector.broadcast %cst_8 : f32 to vector<2x128xf32>
    %15 = arith.mulf %13, %14 : vector<2x128xf32>
    %16 = vector.shape_cast %8 : vector<16x128xf32> to vector<2x8x128xf32>
    %17 = vector.shape_cast %15 : vector<2x128xf32> to vector<2x1x128xf32>
    %18 = vector.broadcast %17 : vector<2x1x128xf32> to vector<2x8x128xf32>
    %19 = arith.addf %16, %18 : vector<2x8x128xf32>
    %20 = vector.shape_cast %19 : vector<2x8x128xf32> to vector<16x128xf32>
    %c0_9 = arith.constant 0 : index
    %c0_10 = arith.constant 0 : index
    %21 = vector.load %arg3[%c0_9, %c0_10] : memref<16x128xf32, #tpu.memory_space<vmem>>, vector<16x128xf32>
    tpu.vector_store %arg3[%c0_9, %c0_10], %20 {strides = array<i32>} : memref<16x128xf32, #tpu.memory_space<vmem>>, vector<16x128xf32>,
    return
  }
}

</mosaic_0001>

<llo_original>
// kernel: encoder_decoder_forward.1
$region0: #{encoder_decoder_forward.1}
  #allocation0 [shape = 'u32[]', space=smem, size = 0x4, offset = 0x4, fixed_abs, tag = 'smem constant byte address 0x4 - core index']
  #allocation1 [shape = 'u32[72,128]{1,0:T(1,128)}', space=vmem, size = 0x9000, scoped, tag = 'internal scratch']
  %s0 = inlined_call_operand.vmem [shape: bf16[16,256], index: 0, kind: input, shape index: {}]
  %s1 = inlined_call_operand.hbm [shape: bf16[384,256], index: 1, kind: input, shape index: {}]
  %s2 = inlined_call_operand.vmem [shape: f32[1,256], index: 2, kind: input, shape index: {}]
  %s3 = inlined_call_operand.hbm [shape: f32[16,128], index: 3, kind: output, shape index: {}]
  %s4 = sld [smem:[#allocation0]]
  $region26: #{encoder_decoder_forward.1} parent=0
    _
  %s6 = ssub.s32 1, %s4
  %s7 = scalar_select 0, %s6, %s4
  $region1: #{encoder_decoder_forward.1} parent=0
    #allocation2 [shape = 'u8[196608]{0}', space=vmem, size = 0x30000, scoped, tag = 'input window, operand 1, single buffered']
    #allocation3 [shape = 's32[1]{0}', space=sflag, size = 0x4, scoped, tag = 'scoped memory for encoder_decoder_forward.1']
    #allocation4 [shape = 's32[1]{0}', space=sflag, size = 0x4, scoped, tag = 'scoped memory for encoder_decoder_forward.1']
    #allocation5 [shape = 'u8[8192]{0}', space=vmem, size = 0x2000, scoped, tag = 'output window, operand 0, single buffered']
    %8 = vsyncpa [#allocation3], 0
    %9 = vsyncpa [#allocation4], 0
    // Predicated region
    $region2: #{encoder_decoder_forward.1} parent=1 // pred_check
      _
    $region3: #{encoder_decoder_forward.1} parent=1 // pred_check_branch
      %11 = sbr.rel (0) target = $region5
    $region4: #{encoder_decoder_forward.1} parent=1 // pred_region
      _
    $region5: #{encoder_decoder_forward.1} parent=1 // pred_fallthru
      _
    // Predicated region
    $region6: #{encoder_decoder_forward.1} parent=1 // pred_check
      _
    $region7: #{encoder_decoder_forward.1} parent=1 // pred_check_branch
      %13 = sbr.rel (0) target = $region9
    $region8: #{encoder_decoder_forward.1} parent=1 // pred_region
      %15 = vsyncadd [#allocation3], 0
      %s16 = sshll.u32 %s1, 4
      %s17 = int_to_ptr.hbm [resolvable:$true] %s16
      %s18 = sshll.u32 [#allocation2], 4
      %s19 = int_to_ptr.vmem [resolvable:$true] %s18
      %24 = dma.hbm_to_vmem [thread:$0]  %s17, 6144, %s19, [#allocation3], 128, 128, 8
    $region9: #{encoder_decoder_forward.1} parent=1 // pred_fallthru
      _
    // Predicated region
    $region10: #{encoder_decoder_forward.1} parent=1 // pred_check
      _
    $region11: #{encoder_decoder_forward.1} parent=1 // pred_check_branch
      %26 = sbr.rel (0) target = $region13
    $region12: #{encoder_decoder_forward.1} parent=1 // pred_region
      _
    $region13: #{encoder_decoder_forward.1} parent=1 // pred_fallthru
      _
    // Predicated region
    $region14: #{encoder_decoder_forward.1} parent=1 // pred_check
      _
    $region15: #{encoder_decoder_forward.1} parent=1 // pred_check_branch
      %28 = sbr.rel (0) target = $region17
    $region16: #{encoder_decoder_forward.1} parent=1 // pred_region
      %30 = dma.done [#allocation3], 6144
    $region17: #{encoder_decoder_forward.1} parent=1 // pred_fallthru
      _
    %v31 = vld [vmem:[%s0] sm:$0xff]
    %v32 = vld [vmem:[%s0 + $0x8] sm:$0xff]
    %v33 = vld [vmem:[#allocation2] sm:$0xff]
    %v34 = vld [vmem:[#allocation2 + $0x8] sm:$0xff]
    %v35 = vld [vmem:[#allocation2 + $0x10] sm:$0xff]
    %v36 = vld [vmem:[#allocation2 + $0x18] sm:$0xff]
    %v37 = vld [vmem:[#allocation2 + $0x20] sm:$0xff]
    %v38 = vld [vmem:[#allocation2 + $0x28] sm:$0xff]
    %v39 = vld [vmem:[#allocation2 + $0x30] sm:$0xff]
    %v40 = vld [vmem:[#allocation2 + $0x38] sm:$0xff]
    %v41 = vld [vmem:[#allocation2 + $0x40] sm:$0xff]
    %v42 = vld [vmem:[#allocation2 + $0x48] sm:$0xff]
    %v43 = vld [vmem:[#allocation2 + $0x50] sm:$0xff]
    %v44 = vld [vmem:[#allocation2 + $0x58] sm:$0xff]
    %v45 = vld [vmem:[#allocation2 + $0x60] sm:$0xff]
    %v46 = vld [vmem:[#allocation2 + $0x68] sm:$0xff]
    %v47 = vld [vmem:[#allocation2 + $0x70] sm:$0xff]
    %v48 = vld [vmem:[#allocation2 + $0x78] sm:$0xff]
    %v49 = vld [vmem:[#allocation2 + $0x80] sm:$0xff]
    %v50 = vld [vmem:[#allocation2 + $0x88] sm:$0xff]
    %v51 = vld [vmem:[#allocation2 + $0x90] sm:$0xff]
    %v52 = vld [vmem:[#allocation2 + $0x98] sm:$0xff]
    %v53 = vld [vmem:[#allocation2 + $0xa0] sm:$0xff]
    %v54 = vld [vmem:[#allocation2 + $0xa8] sm:$0xff]
    %v55 = vld [vmem:[#allocation2 + $0xb0] sm:$0xff]
    %v56 = vld [vmem:[#allocation2 + $0xb8] sm:$0xff]
    %v57 = vld [vmem:[#allocation2 + $0xc0] sm:$0xff]
    %v58 = vld [vmem:[#allocation2 + $0xc8] sm:$0xff]
    %v59 = vld [vmem:[#allocation2 + $0xd0] sm:$0xff]
    %v60 = vld [vmem:[#allocation2 + $0xd8] sm:$0xff]
    %v61 = vld [vmem:[#allocation2 + $0xe0] sm:$0xff]
    %v62 = vld [vmem:[#allocation2 + $0xe8] sm:$0xff]
    %v63 = vld [vmem:[#allocation2 + $0xf0] sm:$0xff]
    %v64 = vld [vmem:[#allocation2 + $0xf8] sm:$0xff]
    %v65 = vld [vmem:[%s2] sm:$0x3]
    %v67 = vperm.slane %v65, 0
    %v68 = vperm.slane %v65, 1
    %v73 = vunpack.c.l.b16 %v31
    %v74 = vunpack.c.h.b16 %v31
    %v75 = vunpack.c.l.b16 %v32
    %v76 = vunpack.c.h.b16 %v32
    %v77 = vpack.c.b16 %v75, %v73
    %v78 = vpack.c.b16 %v76, %v74
    %v113 = vunpack.c.l.b16 %v33
    %v114 = vunpack.c.h.b16 %v33
    %v115 = vunpack.c.l.b16 %v34
    %v116 = vunpack.c.h.b16 %v34
    %v117 = vunpack.c.l.b16 %v35
    %v118 = vunpack.c.h.b16 %v35
    %v119 = vunpack.c.l.b16 %v36
    %v120 = vunpack.c.h.b16 %v36
    %v121 = vunpack.c.l.b16 %v37
    %v122 = vunpack.c.h.b16 %v37
    %v123 = vunpack.c.l.b16 %v38
    %v124 = vunpack.c.h.b16 %v38
    %v125 = vunpack.c.l.b16 %v39
    %v126 = vunpack.c.h.b16 %v39
    %v127 = vunpack.c.l.b16 %v40
    %v128 = vunpack.c.h.b16 %v40
    %v129 = vunpack.c.l.b16 %v41
    %v130 = vunpack.c.h.b16 %v41
    %v131 = vunpack.c.l.b16 %v42
    %v132 = vunpack.c.h.b16 %v42
    %v133 = vunpack.c.l.b16 %v43
    %v134 = vunpack.c.h.b16 %v43
    %v135 = vunpack.c.l.b16 %v44
    %v136 = vunpack.c.h.b16 %v44
    %v137 = vunpack.c.l.b16 %v45
    %v138 = vunpack.c.h.b16 %v45
    %v139 = vunpack.c.l.b16 %v46
    %v140 = vunpack.c.h.b16 %v46
    %v141 = vunpack.c.l.b16 %v47
    %v142 = vunpack.c.h.b16 %v47
    %v143 = vunpack.c.l.b16 %v48
    %v144 = vunpack.c.h.b16 %v48
    %v145 = vunpack.c.l.b16 %v49
    %v146 = vunpack.c.h.b16 %v49
    %v147 = vunpack.c.l.b16 %v50
    %v148 = vunpack.c.h.b16 %v50
    %v149 = vunpack.c.l.b16 %v51
    %v150 = vunpack.c.h.b16 %v51
    %v151 = vunpack.c.l.b16 %v52
    %v152 = vunpack.c.h.b16 %v52
    %v153 = vunpack.c.l.b16 %v53
    %v154 = vunpack.c.h.b16 %v53
    %v155 = vunpack.c.l.b16 %v54
    %v156 = vunpack.c.h.b16 %v54
    %v157 = vunpack.c.l.b16 %v55
    %v158 = vunpack.c.h.b16 %v55
    %v159 = vunpack.c.l.b16 %v56
    %v160 = vunpack.c.h.b16 %v56
    %v161 = vunpack.c.l.b16 %v57
    %v162 = vunpack.c.h.b16 %v57
    %v163 = vunpack.c.l.b16 %v58
    %v164 = vunpack.c.h.b16 %v58
    %v165 = vunpack.c.l.b16 %v59
    %v166 = vunpack.c.h.b16 %v59
    %v167 = vunpack.c.l.b16 %v60
    %v168 = vunpack.c.h.b16 %v60
    %v169 = vunpack.c.l.b16 %v61
    %v170 = vunpack.c.h.b16 %v61
    %v171 = vunpack.c.l.b16 %v62
    %v172 = vunpack.c.h.b16 %v62
    %v173 = vunpack.c.l.b16 %v63
    %v174 = vunpack.c.h.b16 %v63
    %v175 = vunpack.c.l.b16 %v64
    %v176 = vunpack.c.h.b16 %v64
    %v177 = vpack.c.b16 %v115, %v113
    %v178 = vpack.c.b16 %v116, %v114
    %v179 = vpack.c.b16 %v119, %v117
    %v180 = vpack.c.b16 %v120, %v118
    %v181 = vpack.c.b16 %v123, %v121
    %v182 = vpack.c.b16 %v124, %v122
    %v183 = vpack.c.b16 %v127, %v125
    %v184 = vpack.c.b16 %v128, %v126
    %v185 = vpack.c.b16 %v131, %v129
    %v186 = vpack.c.b16 %v132, %v130
    %v187 = vpack.c.b16 %v135, %v133
    %v188 = vpack.c.b16 %v136, %v134
    %v189 = vpack.c.b16 %v139, %v137
    %v190 = vpack.c.b16 %v140, %v138
    %v191 = vpack.c.b16 %v143, %v141
    %v192 = vpack.c.b16 %v144, %v142
    %v193 = vpack.c.b16 %v147, %v145
    %v194 = vpack.c.b16 %v148, %v146
    %v195 = vpack.c.b16 %v151, %v149
    %v196 = vpack.c.b16 %v152, %v150
    %v197 = vpack.c.b16 %v155, %v153
    %v198 = vpack.c.b16 %v156, %v154
    %v199 = vpack.c.b16 %v159, %v157
    %v200 = vpack.c.b16 %v160, %v158
    %v201 = vpack.c.b16 %v163, %v161
    %v202 = vpack.c.b16 %v164, %v162
    %v203 = vpack.c.b16 %v167, %v165
    %v204 = vpack.c.b16 %v168, %v166
    %v205 = vpack.c.b16 %v171, %v169
    %v206 = vpack.c.b16 %v172, %v170
    %v207 = vpack.c.b16 %v175, %v173
    %v208 = vpack.c.b16 %v176, %v174
    %241 = vmatpush.bf16.msra.mxu0 %v191
    %242 = vmatpush.bf16.msra.mxu0 %v189
    %243 = vmatpush.bf16.msra.mxu0 %v187
    %244 = vmatpush.bf16.msra.mxu0 %v185
    %245 = vmatpush.bf16.msra.mxu0 %v183
    %246 = vmatpush.bf16.msra.mxu0 %v181
    %247 = vmatpush.bf16.msra.mxu0 %v179
    %248 = vmatpush.bf16.msra.mxu0 %v177
    %249 = vmatmul.bf16.gmra.mxu0 %v77
    %v250 = vpop.f32.mrf.mxu0
    %v251 = vadd.f32 %v67, %v250
    %v252 = vpop.f32.mrf.mxu0
    %v253 = vadd.f32 %v67, %v252
    %254 = vdwg.mxu0
    %255 = vmatpush.bf16.msra.mxu0 %v207
    %256 = vmatpush.bf16.msra.mxu0 %v205
    %257 = vmatpush.bf16.msra.mxu0 %v203
    %258 = vmatpush.bf16.msra.mxu0 %v201
    %259 = vmatpush.bf16.msra.mxu0 %v199
    %260 = vmatpush.bf16.msra.mxu0 %v197
    %261 = vmatpush.bf16.msra.mxu0 %v195
    %262 = vmatpush.bf16.msra.mxu0 %v193
    %263 = vmatmul.bf16.gmra.mxu0 %v78
    %v264 = vpop.f32.mrf.mxu0
    %v265 = vadd.f32 %v251, %v264
    %v266 = vpop.f32.mrf.mxu0
    %v267 = vadd.f32 %v253, %v266
    %268 = vdwg.mxu0
    %269 = vmatpush.bf16.msra.mxu0 %v192
    %270 = vmatpush.bf16.msra.mxu0 %v190
    %271 = vmatpush.bf16.msra.mxu0 %v188
    %272 = vmatpush.bf16.msra.mxu0 %v186
    %273 = vmatpush.bf16.msra.mxu0 %v184
    %274 = vmatpush.bf16.msra.mxu0 %v182
    %275 = vmatpush.bf16.msra.mxu0 %v180
    %276 = vmatpush.bf16.msra.mxu0 %v178
    %277 = vmatmul.bf16.gmra.mxu0 %v77
    %v278 = vpop.f32.mrf.mxu0
    %v279 = vadd.f32 %v68, %v278
    %v280 = vpop.f32.mrf.mxu0
    %v281 = vadd.f32 %v68, %v280
    %282 = vdwg.mxu0
    %283 = vmatpush.bf16.msra.mxu0 %v208
    %284 = vmatpush.bf16.msra.mxu0 %v206
    %285 = vmatpush.bf16.msra.mxu0 %v204
    %286 = vmatpush.bf16.msra.mxu0 %v202
    %287 = vmatpush.bf16.msra.mxu0 %v200
    %288 = vmatpush.bf16.msra.mxu0 %v198
    %289 = vmatpush.bf16.msra.mxu0 %v196
    %290 = vmatpush.bf16.msra.mxu0 %v194
    %291 = vmatmul.bf16.gmra.mxu0 %v78
    %v292 = vpop.f32.mrf.mxu0
    %v293 = vadd.f32 %v279, %v292
    %v294 = vpop.f32.mrf.mxu0
    %v295 = vadd.f32 %v281, %v294
    %296 = vdwg.mxu0
    %v297 = vtanh.pop %v265
    %v298 = vtanh.pop %v267
    %v299 = vpack.c.bf16 %v298, %v297
    %v300 = vld [vmem:[#allocation2 + $0x100] sm:$0xf]
    %v301 = vld [vmem:[#allocation2 + $0x108] sm:$0xf]
    %v302 = vld [vmem:[#allocation2 + $0x110] sm:$0xf]
    %v303 = vld [vmem:[#allocation2 + $0x118] sm:$0xf]
    %v304 = vld [vmem:[#allocation2 + $0x120] sm:$0xf]
    %v305 = vld [vmem:[#allocation2 + $0x128] sm:$0xf]
    %v306 = vld [vmem:[#allocation2 + $0x130] sm:$0xf]
    %v307 = vld [vmem:[#allocation2 + $0x138] sm:$0xf]
    %v308 = vld [vmem:[#allocation2 + $0x140] sm:$0xf]
    %v309 = vld [vmem:[#allocation2 + $0x148] sm:$0xf]
    %v310 = vld [vmem:[#allocation2 + $0x150] sm:$0xf]
    %v311 = vld [vmem:[#allocation2 + $0x158] sm:$0xf]
    %v312 = vld [vmem:[#allocation2 + $0x160] sm:$0xf]
    %v313 = vld [vmem:[#allocation2 + $0x168] sm:$0xf]
    %v314 = vld [vmem:[#allocation2 + $0x170] sm:$0xf]
    %v315 = vld [vmem:[#allocation2 + $0x178] sm:$0xf]
    %v332 = vunpack.c.l.b16 %v300
    %v333 = vunpack.c.l.b16 %v301
    %v334 = vunpack.c.l.b16 %v302
    %v335 = vunpack.c.l.b16 %v303
    %v336 = vunpack.c.l.b16 %v304
    %v337 = vunpack.c.l.b16 %v305
    %v338 = vunpack.c.l.b16 %v306
    %v339 = vunpack.c.l.b16 %v307
    %v340 = vunpack.c.l.b16 %v308
    %v341 = vunpack.c.l.b16 %v309
    %v342 = vunpack.c.l.b16 %v310
    %v343 = vunpack.c.l.b16 %v311
    %v344 = vunpack.c.l.b16 %v312
    %v345 = vunpack.c.l.b16 %v313
    %v346 = vunpack.c.l.b16 %v314
    %v347 = vunpack.c.l.b16 %v315
    %v348 = vpack.c.b16 %v333, %v332
    %v349 = vpack.c.b16 %v335, %v334
    %v350 = vpack.c.b16 %v337, %v336
    %v351 = vpack.c.b16 %v339, %v338
    %v352 = vpack.c.b16 %v341, %v340
    %v353 = vpack.c.b16 %v343, %v342
    %v354 = vpack.c.b16 %v345, %v344
    %v355 = vpack.c.b16 %v347, %v346
    %364 = vmatpush.bf16.msra.mxu0 %v355
    %365 = vmatpush.bf16.msra.mxu0 %v354
    %366 = vmatpush.bf16.msra.mxu0 %v353
    %367 = vmatpush.bf16.msra.mxu0 %v352
    %368 = vmatpush.bf16.msra.mxu0 %v351
    %369 = vmatpush.bf16.msra.mxu0 %v350
    %370 = vmatpush.bf16.msra.mxu0 %v349
    %371 = vmatpush.bf16.msra.mxu0 %v348
    %372 = vmatmul.bf16.gmra.mxu0 %v299
    %v373 = vpop.f32.mrf.mxu0
    %v374 = vadd.f32 0.0, %v373
    %v375 = vpop.f32.mrf.mxu0
    %v376 = vadd.f32 0.0, %v375
    %377 = vdwg.mxu0
    %v378 = vrot.slane %v374, 4
    %v379 = vadd.f32 %v374, %v378
    %v380 = vrot.slane %v379, 2
    %v381 = vadd.f32 %v379, %v380
    %v382 = vrot.slane %v381, 1
    %v383 = vadd.f32 %v381, %v382
    %v384 = vrot.slane %v376, 4
    %v385 = vadd.f32 %v376, %v384
    %v386 = vrot.slane %v385, 2
    %v387 = vadd.f32 %v385, %v386
    %v388 = vrot.slane %v387, 1
    %v389 = vadd.f32 %v387, %v388
    %v390 = vmul.f32 %v383, 0.125
    %v391 = vmul.f32 %v389, 0.125
    %v392 = vadd.f32 %v293, %v390
    %v393 = vadd.f32 %v295, %v391
    %394 = vst [vmem:[#allocation5] sm:$0xff] %v392
    %395 = vst [vmem:[#allocation5 + $0x8] sm:$0xff] %v393
    // Predicated region
    $region18: #{encoder_decoder_forward.1} parent=1 // pred_check
      _
    $region19: #{encoder_decoder_forward.1} parent=1 // pred_check_branch
      %397 = sbr.rel (0) target = $region21
    $region20: #{encoder_decoder_forward.1} parent=1 // pred_region
      %399 = vsyncadd [#allocation4], 0
      %s400 = sshll.u32 [#allocation5], 4
      %s401 = int_to_ptr.vmem [resolvable:$true] %s400
      %s402 = sshll.u32 %s3, 4
      %s403 = int_to_ptr.hbm [resolvable:$true] %s402
      %408 = dma.vmem_to_hbm [thread:$0]  %s401, 256, %s403, [#allocation4], 128, 128, 8
    $region21: #{encoder_decoder_forward.1} parent=1 // pred_fallthru
      _
    // Predicated region
    $region22: #{encoder_decoder_forward.1} parent=1 // pred_check
      _
    $region23: #{encoder_decoder_forward.1} parent=1 // pred_check_branch
      %410 = sbr.rel (0) target = $region25
    $region24: #{encoder_decoder_forward.1} parent=1 // pred_region
      %412 = dma.done [#allocation4], 256
    $region25: #{encoder_decoder_forward.1} parent=1 // pred_fallthru
      _
    %413 = vsyncpa [#allocation3], 1
    %414 = vsyncpa [#allocation4], 1

</llo_original>
